<compile_context>
chip_gen: v7x
topology: tpu7x:2x2x1
jax: 0.10.0
libtpu: 0.0.40
codegen_flags: <defaults>
</compile_context>

<pallas_src>
import functools

import numpy as np
import jax
import jax.numpy as jnp
from jax.experimental import pallas as pl
from jax.experimental.pallas import tpu as pltpu


def _neuromorphize_kernel(
    # scalar prefetch (SMEM, one entry per padded frame)
    noise_idx_ref, thr_int_ref, cnt_ref, min_time_ref,
    # inputs (VMEM blocks)
    frames_ref,        # (TF, TILE_H, W) int16
    on_noise_ref,      # (P, TILE_H, W) int8  -- resident (block idx const in fb)
    off_noise_ref,     # (P, TILE_H, W) int8
    # output (VMEM block)
    diffs_ref,         # (TF, TILE_H, W) uint8
    # scratch
    state_ref,         # (TILE_H, W) int32
    *maybe_ts,         # (TILE_H, W) int32 timesurface, only if use_refractory
    tf, use_refractory):
    ts_ref = maybe_ts[0] if use_refractory else None
    fb = pl.program_id(1)                     # frame-block index (sequential)

    @pl.when(fb == 0)
    def _init():                              # fresh state for each spatial tile
        state_ref[...] = jnp.zeros_like(state_ref)
        if use_refractory:
            ts_ref[...] = jnp.zeros_like(ts_ref)

    for f in range(tf):                       # static unroll, tf is small
        gi = fb * tf + f                      # global (padded) frame index
        i_t = frames_ref[f].astype(jnp.int32)     # (TILE_H, W)
        ti = thr_int_ref[gi]                      # floor(threshold_i), int32

        diff = i_t - state_ref[...]
        if use_refractory:                    # static config branch
            ready = (ts_ref[...] <= min_time_ref[gi]).astype(jnp.int32)
            diff = diff * ready

        # Integer compares against floor(thr) are exactly equivalent to the
        # PyTorch float compares (diff is integral):
        #   diff >  thr  <=>  diff  >  floor(thr)
        #   |diff| <= thr <=> |diff| <= floor(thr)
        on = diff > ti
        zero = jnp.abs(diff) <= ti
        non_zero = jnp.logical_not(zero)

        # on->255, off->0, zero->127 applied in order on a zero-initialized
        # buffer collapses to two selects:
        out = jnp.where(zero, 127, jnp.where(on, 255, 0))

        # state[non_zero] = i_t[non_zero]; timesurface[non_zero] = cnt
        state_ref[...] = jnp.where(non_zero, i_t, state_ref[...])
        if use_refractory:
            ts_ref[...] = jnp.where(non_zero, cnt_ref[gi], ts_ref[...])

        # fixed-pattern noise from the resident tables (off noise wins)
        nidx = noise_idx_ref[gi]              # cnt % P, precomputed on host
        out = jnp.where(on_noise_ref[nidx].astype(jnp.int32) != 0, 255, out)
        out = jnp.where(off_noise_ref[nidx].astype(jnp.int32) != 0, 0, out)
        diffs_ref[f] = out.astype(jnp.uint8)


def neuromorphize(frames, on_noise, off_noise, *, video_fps,
                  refractory_period_us=0, threshold=0.0,
                  max_tbins=100, dynamic_threshold=True,
                  frames_per_step=4, tile_h=None):
    n_frames, height, width = frames.shape
    assert n_frames <= max_tbins, "clip longer than the diffs buffer"
    max_period_noise = on_noise.shape[0]
    delta_t_us = 1_000_000.0 / video_fps
    use_refractory = refractory_period_us >= delta_t_us

    if tile_h is None:
        tile_h = height
    assert height % tile_h == 0
    # keep int8/uint8 blocks on native (32,128) tile boundaries
    assert tile_h == height or tile_h % 32 == 0
    n_h = height // tile_h
    # TODO(synk): for W not a multiple of 128, pad W on the host to keep the
    # uint8 output store lane-dense (vst instead of vst.msk).

    tf = max(1, min(int(frames_per_step), n_frames))
    n_fb = pl.cdiv(n_frames, tf)
    n_pad_frames = n_fb * tf

    # ---- host-side glue: replicate the Python-float time bookkeeping ----
    cnt_l, mt_l = [], []
    t_us = 0.0
    for _ in range(n_frames):
        t_us += delta_t_us
        cnt_l.append(int(t_us // delta_t_us))
        mt_l.append(int((t_us - refractory_period_us) // delta_t_us))
    cnt = np.asarray(cnt_l, np.int32)
    min_time = np.asarray(mt_l, np.int32)
    noise_idx = (cnt % max_period_noise).astype(np.int32)

    # dtype narrowing: frames int16 (== torch .short()), noise int8
    frames_i16 = frames.astype(jnp.int16)
    on_noise_i8 = (on_noise != 0).astype(jnp.int8)
    off_noise_i8 = (off_noise != 0).astype(jnp.int8)

    # Precompute dynamic thresholds: thr[i+1] depends only on frames[i].
    # Exact int32 sums on device, float64 math on host (matches PyTorch).
    thr = np.full((n_frames,), float(threshold), np.float64)
    if dynamic_threshold and n_frames > 1:
        sums = np.asarray(jnp.sum(frames_i16.astype(jnp.int32), axis=(1, 2)))
        thr[1:] = (sums[:-1].astype(np.float64) / (width * height * 255)
                   * float(threshold))
    thr_int = np.floor(thr).astype(np.int32)

    # pad per-frame scalars / frames to a whole number of frame blocks
    pad = n_pad_frames - n_frames
    if pad:
        noise_idx = np.concatenate([noise_idx, np.zeros(pad, np.int32)])
        thr_int = np.concatenate([thr_int, np.zeros(pad, np.int32)])
        cnt = np.concatenate([cnt, np.full(pad, cnt[-1], np.int32)])
        min_time = np.concatenate([min_time, np.full(pad, min_time[-1], np.int32)])
        frames_i16 = jnp.pad(frames_i16, ((0, pad), (0, 0), (0, 0)))

    kernel = functools.partial(_neuromorphize_kernel,
                               tf=tf, use_refractory=use_refractory)

    frame_map = lambda h, fb, nidx, thr_r, cnt_r, mt_r: (fb, h, 0)
    noise_map = lambda h, fb, nidx, thr_r, cnt_r, mt_r: (0, h, 0)

    scratch = [pltpu.VMEM((tile_h, width), jnp.int32)]            # state
    if use_refractory:
        scratch.append(pltpu.VMEM((tile_h, width), jnp.int32))    # timesurface

    # explicit VMEM budget (keeps double-buffering alive on v7x's 64 MiB)
    est = (2 * tf * tile_h * width * 2              # int16 frames, dbl-buffered
           + 2 * tf * tile_h * width * 1            # uint8 output, dbl-buffered
           + 2 * 2 * max_period_noise * tile_h * width  # resident noise tables
           + len(scratch) * tile_h * width * 4)         # state (+ timesurface)
    vmem_limit = int(min(max(2 * est + (1 << 20), 16 << 20), 100 << 20))

    grid_spec = pltpu.PrefetchScalarGridSpec(
        num_scalar_prefetch=4,
        grid=(n_h, n_fb),
        in_specs=[
            pl.BlockSpec((tf, tile_h, width), frame_map),
            pl.BlockSpec((max_period_noise, tile_h, width), noise_map),
            pl.BlockSpec((max_period_noise, tile_h, width), noise_map),
        ],
        out_specs=pl.BlockSpec((tf, tile_h, width), frame_map),
        scratch_shapes=scratch,
    )

    out = pl.pallas_call(
        kernel,
        out_shape=jax.ShapeDtypeStruct((n_pad_frames, height, width), jnp.uint8),
        grid_spec=grid_spec,
        compiler_params=pltpu.CompilerParams(
            dimension_semantics=("parallel", "arbitrary"),
            vmem_limit_bytes=vmem_limit),
    )(jnp.asarray(noise_idx), jnp.asarray(thr_int), jnp.asarray(cnt),
      jnp.asarray(min_time), frames_i16, on_noise_i8, off_noise_i8)

    # zero-padded tail of `diffs` is a trivial XLA pad, not kernel steps
    diffs = out[:n_frames]
    if max_tbins > n_frames:
        diffs = jnp.concatenate(
            [diffs, jnp.zeros((max_tbins - n_frames, height, width), jnp.uint8)],
            axis=0)
    return diffs


def _reference(frames, on_noise, off_noise, *, video_fps, refractory_period_us=0,
               threshold=0.0, max_tbins=100, dynamic_threshold=True):
    """Pure-numpy mirror of Neuromorphizer.forward (threshold math in f64)."""
    n_frames, H, W = frames.shape
    P = on_noise.shape[0]
    delta_t_us = 1_000_000.0 / video_fps
    state = np.zeros((H, W), np.int32)
    ts = np.zeros((H, W), np.int32)
    diffs = np.zeros((max_tbins, H, W), np.uint8)
    thr = float(threshold)
    base = float(threshold)
    t_us = 0.0
    for i in range(n_frames):
        t_us += delta_t_us
        cnt = int(t_us // delta_t_us)
        i_t = frames[i].astype(np.int16).astype(np.int32)
        diff = i_t - state
        if refractory_period_us >= delta_t_us:
            min_time = (t_us - refractory_period_us) // delta_t_us
            diff = diff * (ts <= min_time)
        on = diff > thr
        off = diff < thr
        zero = np.abs(diff) <= thr
        out = diffs[i].astype(np.int32)
        out[on] = 255
        out[off] = 0
        out[zero] = 127
        nz = ~zero
        state = np.where(nz, i_t, state)
        ts = np.where(nz, cnt, ts)
        out[on_noise[cnt % P] != 0] = 255
        out[off_noise[cnt % P] != 0] = 0
        diffs[i] = out.astype(np.uint8)
        if dynamic_threshold:
            thr = float(i_t.astype(np.int64).sum()) / (W * H * 255) * base
    return diffs


if __name__ == "__main__":
    key = jax.random.PRNGKey(0)
    k_frames, k_on, k_off = jax.random.split(key, 3)

    H, W = 64, 128          # height, width (2 spatial tiles of 32 rows)
    T = 8                   # frames in this clip
    MAX_TBINS = 12          # diffs buffer length (>= T), tail stays zero
    MAX_PERIOD_NOISE = 10
    VIDEO_FPS = 30
    THRESHOLD = 20.0        # base threshold (exercises dynamic_threshold)
    P_NOISE = 0.01          # p_fix_pattern_noise

    # deterministic inputs: 8-bit pixel intensities -> .short() is lossless
    frames = jax.random.randint(k_frames, (T, H, W), 0, 256, dtype=jnp.int32)
    on_noise = jax.random.uniform(k_on, (MAX_PERIOD_NOISE, H, W)) < P_NOISE
    off_noise = jax.random.uniform(k_off, (MAX_PERIOD_NOISE, H, W)) < P_NOISE

    # check both the plain path and the refractory path
    for ref_period in (0, 100_000):
        diffs = neuromorphize(frames, on_noise, off_noise,
                              video_fps=VIDEO_FPS,
                              refractory_period_us=ref_period,
                              threshold=THRESHOLD,
                              max_tbins=MAX_TBINS, dynamic_threshold=True,
                              frames_per_step=4, tile_h=32)
        diffs = jax.block_until_ready(diffs)

        ref = _reference(np.asarray(frames), np.asarray(on_noise),
                         np.asarray(off_noise),
                         video_fps=VIDEO_FPS, refractory_period_us=ref_period,
                         threshold=THRESHOLD,
                         max_tbins=MAX_TBINS, dynamic_threshold=True)
        np.testing.assert_array_equal(np.asarray(diffs), ref)

    print("KERNEL_OK")
</pallas_src>

<mosaic_0001>
module attributes {stable_mosaic.version = 11 : i64} {
  func.func @_neuromorphize_kernel(%arg0: i32, %arg1: i32, %arg2: memref<8xi32, #tpu.memory_space<smem>>, %arg3: memref<8xi32, #tpu.memory_space<smem>>, %arg4: memref<8xi32, #tpu.memory_space<smem>>, %arg5: memref<8xi32, #tpu.memory_space<smem>>, %arg6: memref<4x32x128xi16, #tpu.memory_space<vmem>>, %arg7: memref<10x32x128xi8, #tpu.memory_space<vmem>>, %arg8: memref<10x32x128xi8, #tpu.memory_space<vmem>>, %arg9: memref<4x32x128xi8, #tpu.memory_space<vmem>>, %arg10: memref<32x128xi32, #tpu.memory_space<vmem>>) attributes {dimension_semantics = [#tpu.dimension_semantics<parallel>, #tpu.dimension_semantics<arbitrary>], iteration_bounds = array<i64: 2, 2>, scalar_prefetch = 4 : i64, scratch_operands = 1 : i64, tpu.core_type = #tpu.core_type<tc>, window_params = [{transform_indices = @transform_0, window_bounds = array<i64: 4, 32, 128>}, {transform_indices = @transform_1, window_bounds = array<i64: 10, 32, 128>}, {transform_indices = @transform_2, window_bounds = array<i64: 10, 32, 128>}, {transform_indices = @transform_3, window_bounds = array<i64: 4, 32, 128>}]} {
    %c0_i32 = arith.constant 0 : i32
    %0 = arith.cmpi eq, %arg1, %c0_i32 : i32
    %1 = arith.extui %0 : i1 to i32
    %c0_i32_0 = arith.constant 0 : i32
    %2 = arith.cmpi ne, %1, %c0_i32_0 : i32
    scf.if %2 {
      %c0_i32_94 = arith.constant 0 : i32
      %183 = vector.broadcast %c0_i32_94 : i32 to vector<32x128xi32>
      %c0_95 = arith.constant 0 : index
      %c0_96 = arith.constant 0 : index
      %184 = vector.load %arg10[%c0_95, %c0_96] : memref<32x128xi32, #tpu.memory_space<vmem>>, vector<32x128xi32>
      tpu.vector_store %arg10[%c0_95, %c0_96], %183 {strides = array<i32>} : memref<32x128xi32, #tpu.memory_space<vmem>>, vector<32x128xi32>,
    } else {
    }
    %c4_i32 = arith.constant 4 : i32
    %3 = arith.muli %arg1, %c4_i32 : i32
    %c0_i32_1 = arith.constant 0 : i32
    %4 = arith.addi %3, %c0_i32_1 : i32
    %c0 = arith.constant 0 : index
    %c0_2 = arith.constant 0 : index
    %c0_3 = arith.constant 0 : index
    %5 = vector.load %arg6[%c0, %c0_2, %c0_3] : memref<4x32x128xi16, #tpu.memory_space<vmem>>, vector<1x32x128xi16>
    %6 = vector.shape_cast %5 : vector<1x32x128xi16> to vector<32x128xi16>
    %7 = arith.extsi %6 : vector<32x128xi16> to vector<32x128xi32>
    %8 = arith.index_cast %4 : i32 to index
    %9 = memref.load %arg3[%8] : memref<8xi32, #tpu.memory_space<smem>>
    %c0_4 = arith.constant 0 : index
    %c0_5 = arith.constant 0 : index
    %10 = vector.load %arg10[%c0_4, %c0_5] : memref<32x128xi32, #tpu.memory_space<vmem>>, vector<32x128xi32>
    %11 = arith.subi %7, %10 : vector<32x128xi32>
    %12 = vector.broadcast %9 : i32 to vector<32x128xi32>
    %13 = arith.cmpi sgt, %11, %12 : vector<32x128xi32>
    %14 = math.absi %11 : vector<32x128xi32>
    %15 = vector.broadcast %9 : i32 to vector<32x128xi32>
    %16 = arith.cmpi sle, %14, %15 : vector<32x128xi32>
    %cst = arith.constant dense<true> : vector<32x128xi1>
    %17 = arith.xori %16, %cst : vector<32x128xi1>
    %c255_i32 = arith.constant 255 : i32
    %c0_i32_6 = arith.constant 0 : i32
    %18 = vector.broadcast %c255_i32 : i32 to vector<32x128xi32>
    %19 = vector.broadcast %c0_i32_6 : i32 to vector<32x128xi32>
    %20 = arith.select %13, %18, %19 : vector<32x128xi1>, vector<32x128xi32>
    %c127_i32 = arith.constant 127 : i32
    %21 = vector.broadcast %c127_i32 : i32 to vector<32x128xi32>
    %22 = arith.select %16, %21, %20 : vector<32x128xi1>, vector<32x128xi32>
    %c0_7 = arith.constant 0 : index
    %c0_8 = arith.constant 0 : index
    %23 = vector.load %arg10[%c0_7, %c0_8] : memref<32x128xi32, #tpu.memory_space<vmem>>, vector<32x128xi32>
    %24 = arith.select %17, %7, %23 : vector<32x128xi1>, vector<32x128xi32>
    %c0_9 = arith.constant 0 : index
    %c0_10 = arith.constant 0 : index
    %25 = vector.load %arg10[%c0_9, %c0_10] : memref<32x128xi32, #tpu.memory_space<vmem>>, vector<32x128xi32>
    tpu.vector_store %arg10[%c0_9, %c0_10], %24 {strides = array<i32>} : memref<32x128xi32, #tpu.memory_space<vmem>>, vector<32x128xi32>,
    %26 = arith.index_cast %4 : i32 to index
    %27 = memref.load %arg2[%26] : memref<8xi32, #tpu.memory_space<smem>>
    %28 = arith.index_cast %27 : i32 to index
    %c0_11 = arith.constant 0 : index
    %c0_12 = arith.constant 0 : index
    %29 = vector.load %arg7[%28, %c0_11, %c0_12] : memref<10x32x128xi8, #tpu.memory_space<vmem>>, vector<1x32x128xi8>
    %30 = vector.shape_cast %29 : vector<1x32x128xi8> to vector<32x128xi8>
    %31 = arith.extsi %30 : vector<32x128xi8> to vector<32x128xi32>
    %c0_i32_13 = arith.constant 0 : i32
    %32 = vector.broadcast %c0_i32_13 : i32 to vector<32x128xi32>
    %33 = arith.cmpi ne, %31, %32 : vector<32x128xi32>
    %c255_i32_14 = arith.constant 255 : i32
    %34 = vector.broadcast %c255_i32_14 : i32 to vector<32x128xi32>
    %35 = arith.select %33, %34, %22 : vector<32x128xi1>, vector<32x128xi32>
    %36 = arith.index_cast %27 : i32 to index
    %c0_15 = arith.constant 0 : index
    %c0_16 = arith.constant 0 : index
    %37 = vector.load %arg8[%36, %c0_15, %c0_16] : memref<10x32x128xi8, #tpu.memory_space<vmem>>, vector<1x32x128xi8>
    %38 = vector.shape_cast %37 : vector<1x32x128xi8> to vector<32x128xi8>
    %39 = arith.extsi %38 : vector<32x128xi8> to vector<32x128xi32>
    %c0_i32_17 = arith.constant 0 : i32
    %40 = vector.broadcast %c0_i32_17 : i32 to vector<32x128xi32>
    %41 = arith.cmpi ne, %39, %40 : vector<32x128xi32>
    %c0_i32_18 = arith.constant 0 : i32
    %42 = vector.broadcast %c0_i32_18 : i32 to vector<32x128xi32>
    %43 = arith.select %41, %42, %35 : vector<32x128xi1>, vector<32x128xi32>
    %44 = arith.trunci %43 : vector<32x128xi32> to vector<32x128xi8>
    %c0_19 = arith.constant 0 : index
    %c0_20 = arith.constant 0 : index
    %c0_21 = arith.constant 0 : index
    %45 = vector.load %arg9[%c0_19, %c0_20, %c0_21] : memref<4x32x128xi8, #tpu.memory_space<vmem>>, vector<1x32x128xi8>
    %46 = vector.shape_cast %45 : vector<1x32x128xi8> to vector<32x128xi8>
    %47 = vector.shape_cast %44 : vector<32x128xi8> to vector<1x32x128xi8>
    tpu.vector_store %arg9[%c0_19, %c0_20, %c0_21], %47 {strides = array<i32>} : memref<4x32x128xi8, #tpu.memory_space<vmem>>, vector<1x32x128xi8>,
    %c4_i32_22 = arith.constant 4 : i32
    %48 = arith.muli %arg1, %c4_i32_22 : i32
    %c1_i32 = arith.constant 1 : i32
    %49 = arith.addi %48, %c1_i32 : i32
    %c1 = arith.constant 1 : index
    %c0_23 = arith.constant 0 : index
    %c0_24 = arith.constant 0 : index
    %50 = vector.load %arg6[%c1, %c0_23, %c0_24] : memref<4x32x128xi16, #tpu.memory_space<vmem>>, vector<1x32x128xi16>
    %51 = vector.shape_cast %50 : vector<1x32x128xi16> to vector<32x128xi16>
    %52 = arith.extsi %51 : vector<32x128xi16> to vector<32x128xi32>
    %53 = arith.index_cast %49 : i32 to index
    %54 = memref.load %arg3[%53] : memref<8xi32, #tpu.memory_space<smem>>
    %c0_25 = arith.constant 0 : index
    %c0_26 = arith.constant 0 : index
    %55 = vector.load %arg10[%c0_25, %c0_26] : memref<32x128xi32, #tpu.memory_space<vmem>>, vector<32x128xi32>
    %56 = arith.subi %52, %55 : vector<32x128xi32>
    %57 = vector.broadcast %54 : i32 to vector<32x128xi32>
    %58 = arith.cmpi sgt, %56, %57 : vector<32x128xi32>
    %59 = math.absi %56 : vector<32x128xi32>
    %60 = vector.broadcast %54 : i32 to vector<32x128xi32>
    %61 = arith.cmpi sle, %59, %60 : vector<32x128xi32>
    %cst_27 = arith.constant dense<true> : vector<32x128xi1>
    %62 = arith.xori %61, %cst_27 : vector<32x128xi1>
    %c255_i32_28 = arith.constant 255 : i32
    %c0_i32_29 = arith.constant 0 : i32
    %63 = vector.broadcast %c255_i32_28 : i32 to vector<32x128xi32>
    %64 = vector.broadcast %c0_i32_29 : i32 to vector<32x128xi32>
    %65 = arith.select %58, %63, %64 : vector<32x128xi1>, vector<32x128xi32>
    %c127_i32_30 = arith.constant 127 : i32
    %66 = vector.broadcast %c127_i32_30 : i32 to vector<32x128xi32>
    %67 = arith.select %61, %66, %65 : vector<32x128xi1>, vector<32x128xi32>
    %c0_31 = arith.constant 0 : index
    %c0_32 = arith.constant 0 : index
    %68 = vector.load %arg10[%c0_31, %c0_32] : memref<32x128xi32, #tpu.memory_space<vmem>>, vector<32x128xi32>
    %69 = arith.select %62, %52, %68 : vector<32x128xi1>, vector<32x128xi32>
    %c0_33 = arith.constant 0 : index
    %c0_34 = arith.constant 0 : index
    %70 = vector.load %arg10[%c0_33, %c0_34] : memref<32x128xi32, #tpu.memory_space<vmem>>, vector<32x128xi32>
    tpu.vector_store %arg10[%c0_33, %c0_34], %69 {strides = array<i32>} : memref<32x128xi32, #tpu.memory_space<vmem>>, vector<32x128xi32>,
    %71 = arith.index_cast %49 : i32 to index
    %72 = memref.load %arg2[%71] : memref<8xi32, #tpu.memory_space<smem>>
    %73 = arith.index_cast %72 : i32 to index
    %c0_35 = arith.constant 0 : index
    %c0_36 = arith.constant 0 : index
    %74 = vector.load %arg7[%73, %c0_35, %c0_36] : memref<10x32x128xi8, #tpu.memory_space<vmem>>, vector<1x32x128xi8>
    %75 = vector.shape_cast %74 : vector<1x32x128xi8> to vector<32x128xi8>
    %76 = arith.extsi %75 : vector<32x128xi8> to vector<32x128xi32>
    %c0_i32_37 = arith.constant 0 : i32
    %77 = vector.broadcast %c0_i32_37 : i32 to vector<32x128xi32>
    %78 = arith.cmpi ne, %76, %77 : vector<32x128xi32>
    %c255_i32_38 = arith.constant 255 : i32
    %79 = vector.broadcast %c255_i32_38 : i32 to vector<32x128xi32>
    %80 = arith.select %78, %79, %67 : vector<32x128xi1>, vector<32x128xi32>
    %81 = arith.index_cast %72 : i32 to index
    %c0_39 = arith.constant 0 : index
    %c0_40 = arith.constant 0 : index
    %82 = vector.load %arg8[%81, %c0_39, %c0_40] : memref<10x32x128xi8, #tpu.memory_space<vmem>>, vector<1x32x128xi8>
    %83 = vector.shape_cast %82 : vector<1x32x128xi8> to vector<32x128xi8>
    %84 = arith.extsi %83 : vector<32x128xi8> to vector<32x128xi32>
    %c0_i32_41 = arith.constant 0 : i32
    %85 = vector.broadcast %c0_i32_41 : i32 to vector<32x128xi32>
    %86 = arith.cmpi ne, %84, %85 : vector<32x128xi32>
    %c0_i32_42 = arith.constant 0 : i32
    %87 = vector.broadcast %c0_i32_42 : i32 to vector<32x128xi32>
    %88 = arith.select %86, %87, %80 : vector<32x128xi1>, vector<32x128xi32>
    %89 = arith.trunci %88 : vector<32x128xi32> to vector<32x128xi8>
    %c1_43 = arith.constant 1 : index
    %c0_44 = arith.constant 0 : index
    %c0_45 = arith.constant 0 : index
    %90 = vector.load %arg9[%c1_43, %c0_44, %c0_45] : memref<4x32x128xi8, #tpu.memory_space<vmem>>, vector<1x32x128xi8>
    %91 = vector.shape_cast %90 : vector<1x32x128xi8> to vector<32x128xi8>
    %92 = vector.shape_cast %89 : vector<32x128xi8> to vector<1x32x128xi8>
    tpu.vector_store %arg9[%c1_43, %c0_44, %c0_45], %92 {strides = array<i32>} : memref<4x32x128xi8, #tpu.memory_space<vmem>>, vector<1x32x128xi8>,
    %c4_i32_46 = arith.constant 4 : i32
    %93 = arith.muli %arg1, %c4_i32_46 : i32
    %c2_i32 = arith.constant 2 : i32
    %94 = arith.addi %93, %c2_i32 : i32
    %c2 = arith.constant 2 : index
    %c0_47 = arith.constant 0 : index
    %c0_48 = arith.constant 0 : index
    %95 = vector.load %arg6[%c2, %c0_47, %c0_48] : memref<4x32x128xi16, #tpu.memory_space<vmem>>, vector<1x32x128xi16>
    %96 = vector.shape_cast %95 : vector<1x32x128xi16> to vector<32x128xi16>
    %97 = arith.extsi %96 : vector<32x128xi16> to vector<32x128xi32>
    %98 = arith.index_cast %94 : i32 to index
    %99 = memref.load %arg3[%98] : memref<8xi32, #tpu.memory_space<smem>>
    %c0_49 = arith.constant 0 : index
    %c0_50 = arith.constant 0 : index
    %100 = vector.load %arg10[%c0_49, %c0_50] : memref<32x128xi32, #tpu.memory_space<vmem>>, vector<32x128xi32>
    %101 = arith.subi %97, %100 : vector<32x128xi32>
    %102 = vector.broadcast %99 : i32 to vector<32x128xi32>
    %103 = arith.cmpi sgt, %101, %102 : vector<32x128xi32>
    %104 = math.absi %101 : vector<32x128xi32>
    %105 = vector.broadcast %99 : i32 to vector<32x128xi32>
    %106 = arith.cmpi sle, %104, %105 : vector<32x128xi32>
    %cst_51 = arith.constant dense<true> : vector<32x128xi1>
    %107 = arith.xori %106, %cst_51 : vector<32x128xi1>
    %c255_i32_52 = arith.constant 255 : i32
    %c0_i32_53 = arith.constant 0 : i32
    %108 = vector.broadcast %c255_i32_52 : i32 to vector<32x128xi32>
    %109 = vector.broadcast %c0_i32_53 : i32 to vector<32x128xi32>
    %110 = arith.select %103, %108, %109 : vector<32x128xi1>, vector<32x128xi32>
    %c127_i32_54 = arith.constant 127 : i32
    %111 = vector.broadcast %c127_i32_54 : i32 to vector<32x128xi32>
    %112 = arith.select %106, %111, %110 : vector<32x128xi1>, vector<32x128xi32>
    %c0_55 = arith.constant 0 : index
    %c0_56 = arith.constant 0 : index
    %113 = vector.load %arg10[%c0_55, %c0_56] : memref<32x128xi32, #tpu.memory_space<vmem>>, vector<32x128xi32>
    %114 = arith.select %107, %97, %113 : vector<32x128xi1>, vector<32x128xi32>
    %c0_57 = arith.constant 0 : index
    %c0_58 = arith.constant 0 : index
    %115 = vector.load %arg10[%c0_57, %c0_58] : memref<32x128xi32, #tpu.memory_space<vmem>>, vector<32x128xi32>
    tpu.vector_store %arg10[%c0_57, %c0_58], %114 {strides = array<i32>} : memref<32x128xi32, #tpu.memory_space<vmem>>, vector<32x128xi32>,
    %116 = arith.index_cast %94 : i32 to index
    %117 = memref.load %arg2[%116] : memref<8xi32, #tpu.memory_space<smem>>
    %118 = arith.index_cast %117 : i32 to index
    %c0_59 = arith.constant 0 : index
    %c0_60 = arith.constant 0 : index
    %119 = vector.load %arg7[%118, %c0_59, %c0_60] : memref<10x32x128xi8, #tpu.memory_space<vmem>>, vector<1x32x128xi8>
    %120 = vector.shape_cast %119 : vector<1x32x128xi8> to vector<32x128xi8>
    %121 = arith.extsi %120 : vector<32x128xi8> to vector<32x128xi32>
    %c0_i32_61 = arith.constant 0 : i32
    %122 = vector.broadcast %c0_i32_61 : i32 to vector<32x128xi32>
    %123 = arith.cmpi ne, %121, %122 : vector<32x128xi32>
    %c255_i32_62 = arith.constant 255 : i32
    %124 = vector.broadcast %c255_i32_62 : i32 to vector<32x128xi32>
    %125 = arith.select %123, %124, %112 : vector<32x128xi1>, vector<32x128xi32>
    %126 = arith.index_cast %117 : i32 to index
    %c0_63 = arith.constant 0 : index
    %c0_64 = arith.constant 0 : index
    %127 = vector.load %arg8[%126, %c0_63, %c0_64] : memref<10x32x128xi8, #tpu.memory_space<vmem>>, vector<1x32x128xi8>
    %128 = vector.shape_cast %127 : vector<1x32x128xi8> to vector<32x128xi8>
    %129 = arith.extsi %128 : vector<32x128xi8> to vector<32x128xi32>
    %c0_i32_65 = arith.constant 0 : i32
    %130 = vector.broadcast %c0_i32_65 : i32 to vector<32x128xi32>
    %131 = arith.cmpi ne, %129, %130 : vector<32x128xi32>
    %c0_i32_66 = arith.constant 0 : i32
    %132 = vector.broadcast %c0_i32_66 : i32 to vector<32x128xi32>
    %133 = arith.select %131, %132, %125 : vector<32x128xi1>, vector<32x128xi32>
    %134 = arith.trunci %133 : vector<32x128xi32> to vector<32x128xi8>
    %c2_67 = arith.constant 2 : index
    %c0_68 = arith.constant 0 : index
    %c0_69 = arith.constant 0 : index
    %135 = vector.load %arg9[%c2_67, %c0_68, %c0_69] : memref<4x32x128xi8, #tpu.memory_space<vmem>>, vector<1x32x128xi8>
    %136 = vector.shape_cast %135 : vector<1x32x128xi8> to vector<32x128xi8>
    %137 = vector.shape_cast %134 : vector<32x128xi8> to vector<1x32x128xi8>
    tpu.vector_store %arg9[%c2_67, %c0_68, %c0_69], %137 {strides = array<i32>} : memref<4x32x128xi8, #tpu.memory_space<vmem>>, vector<1x32x128xi8>,
    %c4_i32_70 = arith.constant 4 : i32
    %138 = arith.muli %arg1, %c4_i32_70 : i32
    %c3_i32 = arith.constant 3 : i32
    %139 = arith.addi %138, %c3_i32 : i32
    %c3 = arith.constant 3 : index
    %c0_71 = arith.constant 0 : index
    %c0_72 = arith.constant 0 : index
    %140 = vector.load %arg6[%c3, %c0_71, %c0_72] : memref<4x32x128xi16, #tpu.memory_space<vmem>>, vector<1x32x128xi16>
    %141 = vector.shape_cast %140 : vector<1x32x128xi16> to vector<32x128xi16>
    %142 = arith.extsi %141 : vector<32x128xi16> to vector<32x128xi32>
    %143 = arith.index_cast %139 : i32 to index
    %144 = memref.load %arg3[%143] : memref<8xi32, #tpu.memory_space<smem>>
    %c0_73 = arith.constant 0 : index
    %c0_74 = arith.constant 0 : index
    %145 = vector.load %arg10[%c0_73, %c0_74] : memref<32x128xi32, #tpu.memory_space<vmem>>, vector<32x128xi32>
    %146 = arith.subi %142, %145 : vector<32x128xi32>
    %147 = vector.broadcast %144 : i32 to vector<32x128xi32>
    %148 = arith.cmpi sgt, %146, %147 : vector<32x128xi32>
    %149 = math.absi %146 : vector<32x128xi32>
    %150 = vector.broadcast %144 : i32 to vector<32x128xi32>
    %151 = arith.cmpi sle, %149, %150 : vector<32x128xi32>
    %cst_75 = arith.constant dense<true> : vector<32x128xi1>
    %152 = arith.xori %151, %cst_75 : vector<32x128xi1>
    %c255_i32_76 = arith.constant 255 : i32
    %c0_i32_77 = arith.constant 0 : i32
    %153 = vector.broadcast %c255_i32_76 : i32 to vector<32x128xi32>
    %154 = vector.broadcast %c0_i32_77 : i32 to vector<32x128xi32>
    %155 = arith.select %148, %153, %154 : vector<32x128xi1>, vector<32x128xi32>
    %c127_i32_78 = arith.constant 127 : i32
    %156 = vector.broadcast %c127_i32_78 : i32 to vector<32x128xi32>
    %157 = arith.select %151, %156, %155 : vector<32x128xi1>, vector<32x128xi32>
    %c0_79 = arith.constant 0 : index
    %c0_80 = arith.constant 0 : index
    %158 = vector.load %arg10[%c0_79, %c0_80] : memref<32x128xi32, #tpu.memory_space<vmem>>, vector<32x128xi32>
    %159 = arith.select %152, %142, %158 : vector<32x128xi1>, vector<32x128xi32>
    %c0_81 = arith.constant 0 : index
    %c0_82 = arith.constant 0 : index
    %160 = vector.load %arg10[%c0_81, %c0_82] : memref<32x128xi32, #tpu.memory_space<vmem>>, vector<32x128xi32>
    tpu.vector_store %arg10[%c0_81, %c0_82], %159 {strides = array<i32>} : memref<32x128xi32, #tpu.memory_space<vmem>>, vector<32x128xi32>,
    %161 = arith.index_cast %139 : i32 to index
    %162 = memref.load %arg2[%161] : memref<8xi32, #tpu.memory_space<smem>>
    %163 = arith.index_cast %162 : i32 to index
    %c0_83 = arith.constant 0 : index
    %c0_84 = arith.constant 0 : index
    %164 = vector.load %arg7[%163, %c0_83, %c0_84] : memref<10x32x128xi8, #tpu.memory_space<vmem>>, vector<1x32x128xi8>
    %165 = vector.shape_cast %164 : vector<1x32x128xi8> to vector<32x128xi8>
    %166 = arith.extsi %165 : vector<32x128xi8> to vector<32x128xi32>
    %c0_i32_85 = arith.constant 0 : i32
    %167 = vector.broadcast %c0_i32_85 : i32 to vector<32x128xi32>
    %168 = arith.cmpi ne, %166, %167 : vector<32x128xi32>
    %c255_i32_86 = arith.constant 255 : i32
    %169 = vector.broadcast %c255_i32_86 : i32 to vector<32x128xi32>
    %170 = arith.select %168, %169, %157 : vector<32x128xi1>, vector<32x128xi32>
    %171 = arith.index_cast %162 : i32 to index
    %c0_87 = arith.constant 0 : index
    %c0_88 = arith.constant 0 : index
    %172 = vector.load %arg8[%171, %c0_87, %c0_88] : memref<10x32x128xi8, #tpu.memory_space<vmem>>, vector<1x32x128xi8>
    %173 = vector.shape_cast %172 : vector<1x32x128xi8> to vector<32x128xi8>
    %174 = arith.extsi %173 : vector<32x128xi8> to vector<32x128xi32>
    %c0_i32_89 = arith.constant 0 : i32
    %175 = vector.broadcast %c0_i32_89 : i32 to vector<32x128xi32>
    %176 = arith.cmpi ne, %174, %175 : vector<32x128xi32>
    %c0_i32_90 = arith.constant 0 : i32
    %177 = vector.broadcast %c0_i32_90 : i32 to vector<32x128xi32>
    %178 = arith.select %176, %177, %170 : vector<32x128xi1>, vector<32x128xi32>
    %179 = arith.trunci %178 : vector<32x128xi32> to vector<32x128xi8>
    %c3_91 = arith.constant 3 : index
    %c0_92 = arith.constant 0 : index
    %c0_93 = arith.constant 0 : index
    %180 = vector.load %arg9[%c3_91, %c0_92, %c0_93] : memref<4x32x128xi8, #tpu.memory_space<vmem>>, vector<1x32x128xi8>
    %181 = vector.shape_cast %180 : vector<1x32x128xi8> to vector<32x128xi8>
    %182 = vector.shape_cast %179 : vector<32x128xi8> to vector<1x32x128xi8>
    tpu.vector_store %arg9[%c3_91, %c0_92, %c0_93], %182 {strides = array<i32>} : memref<4x32x128xi8, #tpu.memory_space<vmem>>, vector<1x32x128xi8>,
    return
  }
  func.func @transform_0(%arg0: i32, %arg1: i32, %arg2: memref<8xi32, #tpu.memory_space<smem>>, %arg3: memref<8xi32, #tpu.memory_space<smem>>, %arg4: memref<8xi32, #tpu.memory_space<smem>>, %arg5: memref<8xi32, #tpu.memory_space<smem>>) -> (i32, i32, i32) {
    %c0_i32 = arith.constant 0 : i32
    %c0_i32_0 = arith.constant 0 : i32
    return %arg1, %arg0, %c0_i32 : i32, i32, i32
  }
  func.func @transform_1(%arg0: i32, %arg1: i32, %arg2: memref<8xi32, #tpu.memory_space<smem>>, %arg3: memref<8xi32, #tpu.memory_space<smem>>, %arg4: memref<8xi32, #tpu.memory_space<smem>>, %arg5: memref<8xi32, #tpu.memory_space<smem>>) -> (i32, i32, i32) {
    %c0_i32 = arith.constant 0 : i32
    %c0_i32_0 = arith.constant 0 : i32
    %c0_i32_1 = arith.constant 0 : i32
    return %c0_i32, %arg0, %c0_i32_0 : i32, i32, i32
  }
  func.func @transform_2(%arg0: i32, %arg1: i32, %arg2: memref<8xi32, #tpu.memory_space<smem>>, %arg3: memref<8xi32, #tpu.memory_space<smem>>, %arg4: memref<8xi32, #tpu.memory_space<smem>>, %arg5: memref<8xi32, #tpu.memory_space<smem>>) -> (i32, i32, i32) {
    %c0_i32 = arith.constant 0 : i32
    %c0_i32_0 = arith.constant 0 : i32
    %c0_i32_1 = arith.constant 0 : i32
    return %c0_i32, %arg0, %c0_i32_0 : i32, i32, i32
  }
  func.func @transform_3(%arg0: i32, %arg1: i32, %arg2: memref<8xi32, #tpu.memory_space<smem>>, %arg3: memref<8xi32, #tpu.memory_space<smem>>, %arg4: memref<8xi32, #tpu.memory_space<smem>>, %arg5: memref<8xi32, #tpu.memory_space<smem>>) -> (i32, i32, i32) {
    %c0_i32 = arith.constant 0 : i32
    %c0_i32_0 = arith.constant 0 : i32
    return %arg1, %arg0, %c0_i32 : i32, i32, i32
  }
}

</mosaic_0001>

<llo_original>
// kernel: tpu_custom_call.1
$region0: #{tpu_custom_call.1}
  #allocation0 [shape = 'u32[]', space=smem, size = 0x4, offset = 0x4, fixed_abs, tag = 'smem constant byte address 0x4 - core index']
  #allocation1 [shape = 'u32[144,128]{1,0:T(1,128)}', space=vmem, size = 0x12000, scoped, tag = 'internal scratch']
  #allocation2 [shape = 's32[32,128]{1,0:T(8,128)}', space=vmem, size = 0x4000, scoped, tag = 'scratch operand']
  #allocation3 [shape = 's32[1]{0}', space=sflag, size = 0x4, scoped, tag = 'scoped memory for tpu_custom_call.1']
  #allocation4 [shape = 'u8[512]{0}', space=smem, size = 0x200, scoped, tag = 'prefetched SMEM operand 0']
  #allocation5 [shape = 'u8[512]{0}', space=smem, size = 0x200, scoped, tag = 'prefetched SMEM operand 1']
  #allocation6 [shape = 'u8[512]{0}', space=smem, size = 0x200, scoped, tag = 'prefetched SMEM operand 2']
  #allocation7 [shape = 'u8[512]{0}', space=smem, size = 0x200, scoped, tag = 'prefetched SMEM operand 3']
  #allocation15 [shape = 's32[]', space=sflag, size = 0x4, offset = 0, fixed_abs, tag = 'sflag constant byte address 0x0 - dummy sync flag']
  %s0 = inlined_call_operand.hbm [shape: s32[8], index: 0, kind: input, shape index: {}]
  %s1 = inlined_call_operand.vmem [shape: s32[8], index: 1, kind: input, shape index: {}]
  %s2 = inlined_call_operand.vmem [shape: s32[8], index: 2, kind: input, shape index: {}]
  %s3 = inlined_call_operand.vmem [shape: s32[8], index: 3, kind: input, shape index: {}]
  %s4 = inlined_call_operand.hbm [shape: s16[8,64,128], index: 4, kind: input, shape index: {}]
  %s5 = inlined_call_operand.hbm [shape: s8[10,64,128], index: 5, kind: input, shape index: {}]
  %s6 = inlined_call_operand.hbm [shape: s8[10,64,128], index: 6, kind: input, shape index: {}]
  %s7 = inlined_call_operand.hbm [shape: u8[8,64,128], index: 7, kind: output, shape index: {}]
  %s8 = sld [smem:[#allocation0]]
  $region61: #{tpu_custom_call.1} parent=0
    _
  %s10 = ssub.s32 1, %s8
  %s11 = scalar_select 0, %s10, %s8
  %13 = dma.hbm_to_smem %s0, 16, [#allocation4], [#allocation3]
  %s14 = sshll.u32 %s1, 4
  %s15 = int_to_ptr.vmem [resolvable:$true] %s14
  %17 = dma.vmem_to_smem %s15, 16, [#allocation5], [#allocation3]
  %s18 = sshll.u32 %s2, 4
  %s19 = int_to_ptr.vmem [resolvable:$true] %s18
  %21 = dma.vmem_to_smem %s19, 16, [#allocation6], [#allocation3]
  %s22 = sshll.u32 %s3, 4
  %s23 = int_to_ptr.vmem [resolvable:$true] %s22
  %25 = dma.vmem_to_smem %s23, 16, [#allocation7], [#allocation3]
  %26 = dma.done [#allocation3], 64
  %27 = sfence
  $region1: #{tpu_custom_call.1} parent=0
    #allocation8 [shape = 'u8[65536]{0}', space=vmem, size = 0x10000, scoped, tag = 'input window, operand 4']
    #allocation9 [shape = 's32[2]{0}', space=sflag, size = 0x8, scoped, tag = 'scoped memory for tpu_custom_call.1']
    #allocation10 [shape = 's32[2]{0}', space=sflag, size = 0x8, scoped, tag = 'scoped memory for tpu_custom_call.1']
    #allocation11 [shape = 'u8[81920]{0}', space=vmem, size = 0x14000, scoped, tag = 'input window, operand 5']
    #allocation12 [shape = 's32[2]{0}', space=sflag, size = 0x8, scoped, tag = 'scoped memory for tpu_custom_call.1']
    #allocation13 [shape = 'u8[81920]{0}', space=vmem, size = 0x14000, scoped, tag = 'input window, operand 6']
    #allocation14 [shape = 'u8[32768]{0}', space=vmem, size = 0x8000, scoped, tag = 'output window, operand 0']
    %28 = vsyncpa [#allocation9], 0
    %s29 = scalar_lea.sflag [#allocation9], 1
    %30 = vsyncpa %s29, 0
    %31 = vsyncpa [#allocation12], 0
    %s32 = scalar_lea.sflag [#allocation12], 1
    %33 = vsyncpa %s32, 0
    %34 = vsyncpa [#allocation10], 0
    %s35 = scalar_lea.sflag [#allocation10], 1
    %36 = vsyncpa %s35, 0
    loop: start=0, step=1, limit=6
    $region2: #{tpu_custom_call.1} parent=1 // loop_pre_header
      _
    $region3: #{tpu_custom_call.1} parent=1 // loop_header
      %s38 = sphi 0, %s42
      %p39 = scmp.ge.s32.totalorder %s38, 6
      %s45 = sphi 0, %s57
      %s46 = sphi 0, %s53
      %s47 = sphi 0, %s45
      %s48 = sphi 0, %s46
      %s49 = sphi 0, %s47
      %s50 = sphi 0, %s48
      %s62 = sphi 0, %s64
      %s65 = sphi 0, %s62
      %s66 = sphi 0, %s65
      %s82 = sphi 0, %s66
      %s88 = sphi 0, %s90
      %s91 = sphi 0, %s88
      %s92 = sphi 0, %s91
      %s108 = sphi 0, %s92
      %s114 = sphi 0, %s116
      %s117 = sphi 0, %s114
      %s118 = sphi 0, %s117
      %s134 = sphi 0, %s118
      %s142 = sphi 0, %s144
      %s145 = sphi 0, %s142
      %s146 = sphi 0, %s145
      %s162 = sphi 0, %s146
    $region4: #{tpu_custom_call.1} parent=1 // loop_header_branch
      %41 = sbr.rel (%p39) target = $region8
    $region5: #{tpu_custom_call.1} parent=1 // loop_body
      %s43 = ssub.s32 %s38, 1
      %s44 = ssub.s32 %s38, 2
      %s51 = sadd.s32 1, %s46
      %p52 = scmp.ge.s32.totalorder %s51, 2
      %s53 = scalar_select %p52, 0, %s51
      %s54 = sadd.s32 1, %s45
      %s55 = scalar_select %p52, %s54, %s45
      %p56 = scmp.ge.s32.totalorder %s55, 2
      %s57 = scalar_select %p56, 0, %s55
      %s58 = ssub.s32 %s46, %s53
      %s59 = ssub.s32 %s45, %s57
      %s60 = sor.u32 %s58, %s59
      %p61 = scmp.eq.s32.totalorder %s60, 0
      %s63 = sadd.s32 %s62, 1
      %s64 = scalar_select %p61, %s62, %s63
      %p67 = pneg %p61
      %p68 = scmp.eq.s32.totalorder %s38, 3
      %p69 = por %p67, %p68
      %p70 = scmp.ne.s32.totalorder %s62, %s65
      %p71 = scmp.eq.s32.totalorder %s38, 0
      %p72 = por %p70, %p71
      %p73 = scmp.ne.s32.totalorder %s62, %s65
      %p74 = scmp.eq.s32.totalorder %s43, 3
      %p75 = por %p73, %p74
      %p76 = scmp.ne.s32.totalorder %s65, %s66
      %p77 = scmp.eq.s32.totalorder %s43, 0
      %p78 = por %p76, %p77
      %p79 = scmp.ne.s32.totalorder %s65, %s66
      %p80 = scmp.eq.s32.totalorder %s44, 3
      %p81 = por %p79, %p80
      %p83 = scmp.ne.s32.totalorder %s66, %s82
      %p84 = scmp.eq.s32.totalorder %s44, 0
      %p85 = por %p83, %p84
      %s86 = ssub.s32 %s45, %s57
      %p87 = scmp.eq.s32.totalorder %s86, 0
      %s89 = sadd.s32 %s88, 1
      %s90 = scalar_select %p87, %s88, %s89
      %p93 = pneg %p87
      %p94 = scmp.eq.s32.totalorder %s38, 3
      %p95 = por %p93, %p94
      %p96 = scmp.ne.s32.totalorder %s88, %s91
      %p97 = scmp.eq.s32.totalorder %s38, 0
      %p98 = por %p96, %p97
      %p99 = scmp.ne.s32.totalorder %s88, %s91
      %p100 = scmp.eq.s32.totalorder %s43, 3
      %p101 = por %p99, %p100
      %p102 = scmp.ne.s32.totalorder %s91, %s92
      %p103 = scmp.eq.s32.totalorder %s43, 0
      %p104 = por %p102, %p103
      %p105 = scmp.ne.s32.totalorder %s91, %s92
      %p106 = scmp.eq.s32.totalorder %s44, 3
      %p107 = por %p105, %p106
      %p109 = scmp.ne.s32.totalorder %s92, %s108
      %p110 = scmp.eq.s32.totalorder %s44, 0
      %p111 = por %p109, %p110
      %s112 = ssub.s32 %s45, %s57
      %p113 = scmp.eq.s32.totalorder %s112, 0
      %s115 = sadd.s32 %s114, 1
      %s116 = scalar_select %p113, %s114, %s115
      %p119 = pneg %p113
      %p120 = scmp.eq.s32.totalorder %s38, 3
      %p121 = por %p119, %p120
      %p122 = scmp.ne.s32.totalorder %s114, %s117
      %p123 = scmp.eq.s32.totalorder %s38, 0
      %p124 = por %p122, %p123
      %p125 = scmp.ne.s32.totalorder %s114, %s117
      %p126 = scmp.eq.s32.totalorder %s43, 3
      %p127 = por %p125, %p126
      %p128 = scmp.ne.s32.totalorder %s117, %s118
      %p129 = scmp.eq.s32.totalorder %s43, 0
      %p130 = por %p128, %p129
      %p131 = scmp.ne.s32.totalorder %s117, %s118
      %p132 = scmp.eq.s32.totalorder %s44, 3
      %p133 = por %p131, %p132
      %p135 = scmp.ne.s32.totalorder %s118, %s134
      %p136 = scmp.eq.s32.totalorder %s44, 0
      %p137 = por %p135, %p136
      %s138 = ssub.s32 %s46, %s53
      %s139 = ssub.s32 %s45, %s57
      %s140 = sor.u32 %s138, %s139
      %p141 = scmp.eq.s32.totalorder %s140, 0
      %s143 = sadd.s32 %s142, 1
      %s144 = scalar_select %p141, %s142, %s143
      %p147 = pneg %p141
      %p148 = scmp.eq.s32.totalorder %s38, 3
      %p149 = por %p147, %p148
      %p150 = scmp.ne.s32.totalorder %s142, %s145
      %p151 = scmp.eq.s32.totalorder %s38, 0
      %p152 = por %p150, %p151
      %p153 = scmp.ne.s32.totalorder %s142, %s145
      %p154 = scmp.eq.s32.totalorder %s43, 3
      %p155 = por %p153, %p154
      %p156 = scmp.ne.s32.totalorder %s145, %s146
      %p157 = scmp.eq.s32.totalorder %s43, 0
      %p158 = por %p156, %p157
      %p159 = scmp.ne.s32.totalorder %s145, %s146
      %p160 = scmp.eq.s32.totalorder %s44, 3
      %p161 = por %p159, %p160
      %p163 = scmp.ne.s32.totalorder %s146, %s162
      %p164 = scmp.eq.s32.totalorder %s44, 0
      %p165 = por %p163, %p164
      %p166 = scmp.le.s32.totalorder 1, %s38
      %p167 = scmp.lt.s32.totalorder %s38, 5
      %p168 = pnand %p166, %p167
      %p169 = pneg %p168
      // Predicated region
      $region9: #{tpu_custom_call.1} parent=5 // pred_check
        _
      $region10: #{tpu_custom_call.1} parent=5 // pred_check_branch
        %171 = sbr.rel (%p168) target = $region12
      $region11: #{tpu_custom_call.1} parent=5 // pred_region
        %s172 = ssub.s32 %s38, 1
      $region12: #{tpu_custom_call.1} parent=5 // pred_fallthru
        _
      %p173 = scmp.lt.s32.totalorder %s38, 4
      // Predicated region
      $region13: #{tpu_custom_call.1} parent=5 // pred_check
        %p174 = pneg %p173
      $region14: #{tpu_custom_call.1} parent=5 // pred_check_branch
        %176 = sbr.rel (%p174) target = $region16
      $region15: #{tpu_custom_call.1} parent=5 // pred_region
        // Predicated region
        $region17: #{tpu_custom_call.1} parent=15 // pred_check
          %p177 = pneg %p72
        $region18: #{tpu_custom_call.1} parent=15 // pred_check_branch
          %179 = sbr.rel (%p177) target = $region20
        $region19: #{tpu_custom_call.1} parent=15 // pred_region
          #allocation16 [shape = 'u32[6]{0}', space=smem, size = 0x18, scoped, tag = 'DMA stride descriptor']
          %s180 = sand.u32 %s62, 1
          %s181 = scalar_lea.sflag [#allocation9], %s180
          %s182 = sand.u32 %s62, 1
          %s183 = smul.addr %s182, 64
          %s184 = scalar_lea.vmem [#allocation8], %s183
          %s185 = smul.u32 4, %s46
          %s186 = smul.u32 4, %s45
          %s188 = ssub.s32 1024, 1024
          %189 = vsyncadd %s181, %s188
          %s190 = smul.addr %s185, 8
          %s191 = sadd.s32 %s186, %s190
          %s192 = smul.addr %s191, 64
          %s193 = scalar_lea.hbm %s4, %s192
          %s195 = sshll.u32 1, 14
          %s196 = sxor.u32 4294967295, %s195
          %s198 = sld [smem:[#allocation0]]
          %s199 = sadd.s32 2, %s198
          %s201 = sshll.u32 7, 26
          %s202 = sxor.u32 4294967295, %s201
          %s203 = sand.u32 0, %s202
          %s204 = sshll.u32 %s199, 26
          %s205 = sor.u32 %s203, %s204
          %s206 = sshll.u32 %s184, 4
          %s207 = int_to_ptr.vmem [resolvable:$true] %s206
          %213 = sst [smem:[#allocation16]] 512
          %s214 = scalar_lea.smem [#allocation16], 1
          %215 = sst [smem:[%s214]] 256
          %s216 = scalar_lea.smem [#allocation16], 2
          %217 = sst [smem:[%s216]] 4
          %s218 = scalar_lea.smem [#allocation16], 3
          %219 = sst [smem:[%s218]] 64
          %s220 = scalar_lea.smem [#allocation16], 4
          %221 = sst [smem:[%s220]] 64
          %s222 = scalar_lea.smem [#allocation16], 5
          %223 = sst [smem:[%s222]] 4
          %225 = dma.general %s193, 1024, %s207, %s181, [#allocation15], [#allocation16], %s205, 0
        $region20: #{tpu_custom_call.1} parent=15 // pred_fallthru
          _
        // Predicated region
        $region21: #{tpu_custom_call.1} parent=15 // pred_check
          %p226 = pneg %p98
        $region22: #{tpu_custom_call.1} parent=15 // pred_check_branch
          %228 = sbr.rel (%p226) target = $region24
        $region23: #{tpu_custom_call.1} parent=15 // pred_region
          %s229 = sand.u32 %s38, 1
          %s230 = scalar_lea.sflag [#allocation12], %s229
          %s231 = sand.u32 %s88, 1
          %s232 = smul.addr %s231, 80
          %s233 = scalar_lea.vmem [#allocation11], %s232
          %s235 = ssub.s32 1280, 1280
          %236 = vsyncadd %s230, %s235
          %s237 = smul.addr %s45, 128
          %s238 = scalar_lea.hbm %s5, %s237
          %s239 = sshll.u32 %s233, 4
          %s240 = int_to_ptr.vmem [resolvable:$true] %s239
          %245 = dma.hbm_to_vmem [thread:$0]  %s238, 1280, %s240, %s230, 256, 128, 8
        $region24: #{tpu_custom_call.1} parent=15 // pred_fallthru
          _
        // Predicated region
        $region25: #{tpu_custom_call.1} parent=15 // pred_check
          %p246 = pneg %p124
        $region26: #{tpu_custom_call.1} parent=15 // pred_check_branch
          %248 = sbr.rel (%p246) target = $region28
        $region27: #{tpu_custom_call.1} parent=15 // pred_region
          %s249 = sand.u32 %s38, 1
          %s250 = scalar_lea.sflag [#allocation12], %s249
          %s251 = sand.u32 %s114, 1
          %s252 = smul.addr %s251, 80
          %s253 = scalar_lea.vmem [#allocation13], %s252
          %s255 = ssub.s32 1280, 1280
          %256 = vsyncadd %s250, %s255
          %s257 = smul.addr %s45, 128
          %s258 = scalar_lea.hbm %s6, %s257
          %s259 = sshll.u32 %s253, 4
          %s260 = int_to_ptr.vmem [resolvable:$true] %s259
          %265 = dma.hbm_to_vmem [thread:$0]  %s258, 1280, %s260, %s250, 256, 128, 8
        $region28: #{tpu_custom_call.1} parent=15 // pred_fallthru
          _
      $region16: #{tpu_custom_call.1} parent=5 // pred_fallthru
        _
      %p266 = scmp.le.s32.totalorder 1, %s38
      %p267 = scmp.lt.s32.totalorder %s38, 5
      %p268 = pnand %p266, %p267
      %p269 = pneg %p268
      // Predicated region
      $region29: #{tpu_custom_call.1} parent=5 // pred_check
        _
      $region30: #{tpu_custom_call.1} parent=5 // pred_check_branch
        %271 = sbr.rel (%p268) target = $region32
      $region31: #{tpu_custom_call.1} parent=5 // pred_region
        %s272 = ssub.s32 %s38, 1
        %s273 = sand.u32 %s65, 1
        %s274 = scalar_lea.sflag [#allocation9], %s273
        %s275 = sand.u32 %s65, 1
        %s276 = smul.addr %s275, 64
        %s277 = scalar_lea.vmem [#allocation8], %s276
        // Predicated region
        $region33: #{tpu_custom_call.1} parent=31 // pred_check
          %p278 = pneg %p78
        $region34: #{tpu_custom_call.1} parent=31 // pred_check_branch
          %280 = sbr.rel (%p278) target = $region36
        $region35: #{tpu_custom_call.1} parent=31 // pred_region
          %281 = dma.done %s274, 1024
        $region36: #{tpu_custom_call.1} parent=31 // pred_fallthru
          _
        %s282 = sand.u32 %s43, 1
        %s283 = scalar_lea.sflag [#allocation12], %s282
        %s284 = sand.u32 %s91, 1
        %s285 = smul.addr %s284, 80
        %s286 = scalar_lea.vmem [#allocation11], %s285
        // Predicated region
        $region37: #{tpu_custom_call.1} parent=31 // pred_check
          %p287 = pneg %p104
        $region38: #{tpu_custom_call.1} parent=31 // pred_check_branch
          %289 = sbr.rel (%p287) target = $region40
        $region39: #{tpu_custom_call.1} parent=31 // pred_region
          %290 = dma.done %s283, 1280
        $region40: #{tpu_custom_call.1} parent=31 // pred_fallthru
          _
        %s291 = sand.u32 %s43, 1
        %s292 = scalar_lea.sflag [#allocation12], %s291
        %s293 = sand.u32 %s117, 1
        %s294 = smul.addr %s293, 80
        %s295 = scalar_lea.vmem [#allocation13], %s294
        // Predicated region
        $region41: #{tpu_custom_call.1} parent=31 // pred_check
          %p296 = pneg %p130
        $region42: #{tpu_custom_call.1} parent=31 // pred_check_branch
          %298 = sbr.rel (%p296) target = $region44
        $region43: #{tpu_custom_call.1} parent=31 // pred_region
          %299 = dma.done %s292, 1280
        $region44: #{tpu_custom_call.1} parent=31 // pred_fallthru
          _
        %s300 = sand.u32 %s65, 1
        %s301 = scalar_lea.sflag [#allocation9], %s300
        %s302 = sand.u32 %s65, 1
        %s303 = smul.addr %s302, 64
        %s304 = scalar_lea.vmem [#allocation8], %s303
        %p305 = pneg %p78
        %p306 = pneg %p75
        %s307 = sand.u32 %s43, 1
        %s308 = scalar_lea.sflag [#allocation12], %s307
        %s309 = sand.u32 %s91, 1
        %s310 = smul.addr %s309, 80
        %s311 = scalar_lea.vmem [#allocation11], %s310
        %p312 = pneg %p104
        %p313 = pneg %p101
        %s314 = sand.u32 %s43, 1
        %s315 = scalar_lea.sflag [#allocation12], %s314
        %s316 = sand.u32 %s117, 1
        %s317 = smul.addr %s316, 80
        %s318 = scalar_lea.vmem [#allocation13], %s317
        %p319 = pneg %p130
        %p320 = pneg %p127
        %p321 = pneg %p158
        %p322 = pneg %p155
        %s323 = sand.u32 %s145, 1
        %s324 = scalar_lea.sflag [#allocation10], %s323
        %s325 = sand.u32 %s145, 1
        %s326 = smul.addr %s325, 32
        %s327 = scalar_lea.vmem [#allocation14], %s326
        %s328 = smul.u32 4, %s48
        %s329 = smul.u32 4, %s47
        %s330 = smul.u32 4, %s48
        %p331 = scmp.eq.s32.totalorder %s48, 0
        // Predicated region
        $region45: #{tpu_custom_call.1} parent=31 // pred_check
          %p332 = pneg %p331
        $region46: #{tpu_custom_call.1} parent=31 // pred_check_branch
          %334 = sbr.rel (%p332) target = $region48
        $region47: #{tpu_custom_call.1} parent=31 // pred_region
          %335 = vst [vmem:[#allocation2] sm:$0xff] 0
          %336 = vst [vmem:[#allocation2 + $0x8] sm:$0xff] 0
          %337 = vst [vmem:[#allocation2 + $0x10] sm:$0xff] 0
          %338 = vst [vmem:[#allocation2 + $0x18] sm:$0xff] 0
        $region48: #{tpu_custom_call.1} parent=31 // pred_fallthru
          _
        %s339 = smul.u32 %s48, 4
        %v340 = vld [vmem:[%s277] sm:$0xf]
        %v341 = vld [vmem:[%s277 + $0x4] sm:$0xf]
        %v342 = vld [vmem:[%s277 + $0x8] sm:$0xf]
        %v343 = vld [vmem:[%s277 + $0xc] sm:$0xf]
        %v344 = vunpack.c.l.b16 %v340
        %v345 = vunpack.c.l.b16 %v341
        %v346 = vunpack.c.l.b16 %v342
        %v347 = vunpack.c.l.b16 %v343
        %s348 = sld [smem:[#allocation5 + %s339]]
        %v349 = vld [vmem:[#allocation2] sm:$0xff]
        %v350 = vld [vmem:[#allocation2 + $0x8] sm:$0xff]
        %v351 = vld [vmem:[#allocation2 + $0x10] sm:$0xff]
        %v352 = vld [vmem:[#allocation2 + $0x18] sm:$0xff]
        %v353 = vsub.s32 %v344, %v349
        %v354 = vsub.s32 %v345, %v350
        %v355 = vsub.s32 %v346, %v351
        %v356 = vsub.s32 %v347, %v352
        %v357 = vstv %s348
        %vm358 = vcmp.gt.s32.totalorder %v353, %v357
        %vm359 = vcmp.gt.s32.totalorder %v354, %v357
        %vm360 = vcmp.gt.s32.totalorder %v355, %v357
        %vm361 = vcmp.gt.s32.totalorder %v356, %v357
        %vm362 = vcmp.lt.s32.totalorder %v353, 0
        %v363 = vsub.s32 0, %v353
        %v364 = vsel %vm362, %v363, %v353
        %vm365 = vcmp.lt.s32.totalorder %v354, 0
        %v366 = vsub.s32 0, %v354
        %v367 = vsel %vm365, %v366, %v354
        %vm368 = vcmp.lt.s32.totalorder %v355, 0
        %v369 = vsub.s32 0, %v355
        %v370 = vsel %vm368, %v369, %v355
        %vm371 = vcmp.lt.s32.totalorder %v356, 0
        %v372 = vsub.s32 0, %v356
        %v373 = vsel %vm371, %v372, %v356
        %vm374 = vcmp.le.s32.totalorder %v364, %v357
        %vm375 = vcmp.le.s32.totalorder %v367, %v357
        %vm376 = vcmp.le.s32.totalorder %v370, %v357
        %vm377 = vcmp.le.s32.totalorder %v373, %v357
        %vm378 = vmxor %vm374, 1
        %vm379 = vmxor %vm375, 1
        %vm380 = vmxor %vm376, 1
        %vm381 = vmxor %vm377, 1
        %v382 = vsel %vm358, 255, 0
        %v383 = vsel %vm359, 255, 0
        %v384 = vsel %vm360, 255, 0
        %v385 = vsel %vm361, 255, 0
        %v386 = vsel %vm374, 127, %v382
        %v387 = vsel %vm375, 127, %v383
        %v388 = vsel %vm376, 127, %v384
        %v389 = vsel %vm377, 127, %v385
        %v390 = vsel %vm378, %v344, %v349
        %v391 = vsel %vm379, %v345, %v350
        %v392 = vsel %vm380, %v346, %v351
        %v393 = vsel %vm381, %v347, %v352
        %394 = vst [vmem:[#allocation2] sm:$0xff] %v390
        %395 = vst [vmem:[#allocation2 + $0x8] sm:$0xff] %v391
        %396 = vst [vmem:[#allocation2 + $0x10] sm:$0xff] %v392
        %397 = vst [vmem:[#allocation2 + $0x18] sm:$0xff] %v393
        %s398 = sld [smem:[#allocation4 + %s339]]
        %s399 = smul.addr %s398, 8
        %s400 = scalar_lea.vmem %s286, %s399 [#allocation11]
        %v401 = vld [vmem:[%s400] sm:$0xff]
        %v402 = vunpack.c.0.s8 %v401
        %v403 = vunpack.c.1.s8 %v401
        %v404 = vunpack.c.2.s8 %v401
        %v405 = vunpack.c.3.s8 %v401
        %vm406 = vcmp.ne.s32.totalorder %v402, 0
        %vm407 = vcmp.ne.s32.totalorder %v403, 0
        %vm408 = vcmp.ne.s32.totalorder %v404, 0
        %vm409 = vcmp.ne.s32.totalorder %v405, 0
        %v410 = vsel %vm406, 255, %v386
        %v411 = vsel %vm407, 255, %v387
        %v412 = vsel %vm408, 255, %v388
        %v413 = vsel %vm409, 255, %v389
        %s414 = smul.addr %s398, 8
        %s415 = scalar_lea.vmem %s295, %s414 [#allocation13]
        %v416 = vld [vmem:[%s415] sm:$0xff]
        %v417 = vunpack.c.0.s8 %v416
        %v418 = vunpack.c.1.s8 %v416
        %v419 = vunpack.c.2.s8 %v416
        %v420 = vunpack.c.3.s8 %v416
        %vm421 = vcmp.ne.s32.totalorder %v417, 0
        %vm422 = vcmp.ne.s32.totalorder %v418, 0
        %vm423 = vcmp.ne.s32.totalorder %v419, 0
        %vm424 = vcmp.ne.s32.totalorder %v420, 0
        %v425 = vsel %vm421, 0, %v410
        %v426 = vsel %vm422, 0, %v411
        %v427 = vsel %vm423, 0, %v412
        %v428 = vsel %vm424, 0, %v413
        %v429 = vpack.c.b16 %v426, %v425
        %v430 = vpack.c.b16 %v428, %v427
        %v431 = vpack.c.b8 %v430, %v429
        %432 = vst [vmem:[%s327] sm:$0xff] %v431
        %s433 = sadd.s32 %s339, 1
        %s434 = scalar_lea.vmem %s277, 16 [#allocation8]
        %v435 = vld [vmem:[%s434] sm:$0xf]
        %v436 = vld [vmem:[%s434 + $0x4] sm:$0xf]
        %v437 = vld [vmem:[%s434 + $0x8] sm:$0xf]
        %v438 = vld [vmem:[%s434 + $0xc] sm:$0xf]
        %v439 = vunpack.c.l.b16 %v435
        %v440 = vunpack.c.l.b16 %v436
        %v441 = vunpack.c.l.b16 %v437
        %v442 = vunpack.c.l.b16 %v438
        %s443 = sld [smem:[#allocation5 + %s433]]
        %v444 = vld [vmem:[#allocation2] sm:$0xff]
        %v445 = vld [vmem:[#allocation2 + $0x8] sm:$0xff]
        %v446 = vld [vmem:[#allocation2 + $0x10] sm:$0xff]
        %v447 = vld [vmem:[#allocation2 + $0x18] sm:$0xff]
        %v448 = vsub.s32 %v439, %v444
        %v449 = vsub.s32 %v440, %v445
        %v450 = vsub.s32 %v441, %v446
        %v451 = vsub.s32 %v442, %v447
        %v452 = vstv %s443
        %vm453 = vcmp.gt.s32.totalorder %v448, %v452
        %vm454 = vcmp.gt.s32.totalorder %v449, %v452
        %vm455 = vcmp.gt.s32.totalorder %v450, %v452
        %vm456 = vcmp.gt.s32.totalorder %v451, %v452
        %vm457 = vcmp.lt.s32.totalorder %v448, 0
        %v458 = vsub.s32 0, %v448
        %v459 = vsel %vm457, %v458, %v448
        %vm460 = vcmp.lt.s32.totalorder %v449, 0
        %v461 = vsub.s32 0, %v449
        %v462 = vsel %vm460, %v461, %v449
        %vm463 = vcmp.lt.s32.totalorder %v450, 0
        %v464 = vsub.s32 0, %v450
        %v465 = vsel %vm463, %v464, %v450
        %vm466 = vcmp.lt.s32.totalorder %v451, 0
        %v467 = vsub.s32 0, %v451
        %v468 = vsel %vm466, %v467, %v451
        %vm469 = vcmp.le.s32.totalorder %v459, %v452
        %vm470 = vcmp.le.s32.totalorder %v462, %v452
        %vm471 = vcmp.le.s32.totalorder %v465, %v452
        %vm472 = vcmp.le.s32.totalorder %v468, %v452
        %vm473 = vmxor %vm469, 1
        %vm474 = vmxor %vm470, 1
        %vm475 = vmxor %vm471, 1
        %vm476 = vmxor %vm472, 1
        %v477 = vsel %vm453, 255, 0
        %v478 = vsel %vm454, 255, 0
        %v479 = vsel %vm455, 255, 0
        %v480 = vsel %vm456, 255, 0
        %v481 = vsel %vm469, 127, %v477
        %v482 = vsel %vm470, 127, %v478
        %v483 = vsel %vm471, 127, %v479
        %v484 = vsel %vm472, 127, %v480
        %v485 = vsel %vm473, %v439, %v444
        %v486 = vsel %vm474, %v440, %v445
        %v487 = vsel %vm475, %v441, %v446
        %v488 = vsel %vm476, %v442, %v447
        %489 = vst [vmem:[#allocation2] sm:$0xff] %v485
        %490 = vst [vmem:[#allocation2 + $0x8] sm:$0xff] %v486
        %491 = vst [vmem:[#allocation2 + $0x10] sm:$0xff] %v487
        %492 = vst [vmem:[#allocation2 + $0x18] sm:$0xff] %v488
        %s493 = sld [smem:[#allocation4 + %s433]]
        %s494 = smul.addr %s493, 8
        %s495 = scalar_lea.vmem %s286, %s494 [#allocation11]
        %v496 = vld [vmem:[%s495] sm:$0xff]
        %v497 = vunpack.c.0.s8 %v496
        %v498 = vunpack.c.1.s8 %v496
        %v499 = vunpack.c.2.s8 %v496
        %v500 = vunpack.c.3.s8 %v496
        %vm501 = vcmp.ne.s32.totalorder %v497, 0
        %vm502 = vcmp.ne.s32.totalorder %v498, 0
        %vm503 = vcmp.ne.s32.totalorder %v499, 0
        %vm504 = vcmp.ne.s32.totalorder %v500, 0
        %v505 = vsel %vm501, 255, %v481
        %v506 = vsel %vm502, 255, %v482
        %v507 = vsel %vm503, 255, %v483
        %v508 = vsel %vm504, 255, %v484
        %s509 = smul.addr %s493, 8
        %s510 = scalar_lea.vmem %s295, %s509 [#allocation13]
        %v511 = vld [vmem:[%s510] sm:$0xff]
        %v512 = vunpack.c.0.s8 %v511
        %v513 = vunpack.c.1.s8 %v511
        %v514 = vunpack.c.2.s8 %v511
        %v515 = vunpack.c.3.s8 %v511
        %vm516 = vcmp.ne.s32.totalorder %v512, 0
        %vm517 = vcmp.ne.s32.totalorder %v513, 0
        %vm518 = vcmp.ne.s32.totalorder %v514, 0
        %vm519 = vcmp.ne.s32.totalorder %v515, 0
        %v520 = vsel %vm516, 0, %v505
        %v521 = vsel %vm517, 0, %v506
        %v522 = vsel %vm518, 0, %v507
        %v523 = vsel %vm519, 0, %v508
        %v524 = vpack.c.b16 %v521, %v520
        %v525 = vpack.c.b16 %v523, %v522
        %v526 = vpack.c.b8 %v525, %v524
        %s527 = scalar_lea.vmem %s327, 8 [#allocation14]
        %528 = vst [vmem:[%s527] sm:$0xff] %v526
        %s529 = sadd.s32 %s339, 2
        %s530 = scalar_lea.vmem %s277, 32 [#allocation8]
        %v531 = vld [vmem:[%s530] sm:$0xf]
        %v532 = vld [vmem:[%s530 + $0x4] sm:$0xf]
        %v533 = vld [vmem:[%s530 + $0x8] sm:$0xf]
        %v534 = vld [vmem:[%s530 + $0xc] sm:$0xf]
        %v535 = vunpack.c.l.b16 %v531
        %v536 = vunpack.c.l.b16 %v532
        %v537 = vunpack.c.l.b16 %v533
        %v538 = vunpack.c.l.b16 %v534
        %s539 = sld [smem:[#allocation5 + %s529]]
        %v540 = vld [vmem:[#allocation2] sm:$0xff]
        %v541 = vld [vmem:[#allocation2 + $0x8] sm:$0xff]
        %v542 = vld [vmem:[#allocation2 + $0x10] sm:$0xff]
        %v543 = vld [vmem:[#allocation2 + $0x18] sm:$0xff]
        %v544 = vsub.s32 %v535, %v540
        %v545 = vsub.s32 %v536, %v541
        %v546 = vsub.s32 %v537, %v542
        %v547 = vsub.s32 %v538, %v543
        %v548 = vstv %s539
        %vm549 = vcmp.gt.s32.totalorder %v544, %v548
        %vm550 = vcmp.gt.s32.totalorder %v545, %v548
        %vm551 = vcmp.gt.s32.totalorder %v546, %v548
        %vm552 = vcmp.gt.s32.totalorder %v547, %v548
        %vm553 = vcmp.lt.s32.totalorder %v544, 0
        %v554 = vsub.s32 0, %v544
        %v555 = vsel %vm553, %v554, %v544
        %vm556 = vcmp.lt.s32.totalorder %v545, 0
        %v557 = vsub.s32 0, %v545
        %v558 = vsel %vm556, %v557, %v545
        %vm559 = vcmp.lt.s32.totalorder %v546, 0
        %v560 = vsub.s32 0, %v546
        %v561 = vsel %vm559, %v560, %v546
        %vm562 = vcmp.lt.s32.totalorder %v547, 0
        %v563 = vsub.s32 0, %v547
        %v564 = vsel %vm562, %v563, %v547
        %vm565 = vcmp.le.s32.totalorder %v555, %v548
        %vm566 = vcmp.le.s32.totalorder %v558, %v548
        %vm567 = vcmp.le.s32.totalorder %v561, %v548
        %vm568 = vcmp.le.s32.totalorder %v564, %v548
        %vm569 = vmxor %vm565, 1
        %vm570 = vmxor %vm566, 1
        %vm571 = vmxor %vm567, 1
        %vm572 = vmxor %vm568, 1
        %v573 = vsel %vm549, 255, 0
        %v574 = vsel %vm550, 255, 0
        %v575 = vsel %vm551, 255, 0
        %v576 = vsel %vm552, 255, 0
        %v577 = vsel %vm565, 127, %v573
        %v578 = vsel %vm566, 127, %v574
        %v579 = vsel %vm567, 127, %v575
        %v580 = vsel %vm568, 127, %v576
        %v581 = vsel %vm569, %v535, %v540
        %v582 = vsel %vm570, %v536, %v541
        %v583 = vsel %vm571, %v537, %v542
        %v584 = vsel %vm572, %v538, %v543
        %585 = vst [vmem:[#allocation2] sm:$0xff] %v581
        %586 = vst [vmem:[#allocation2 + $0x8] sm:$0xff] %v582
        %587 = vst [vmem:[#allocation2 + $0x10] sm:$0xff] %v583
        %588 = vst [vmem:[#allocation2 + $0x18] sm:$0xff] %v584
        %s589 = sld [smem:[#allocation4 + %s529]]
        %s590 = smul.addr %s589, 8
        %s591 = scalar_lea.vmem %s286, %s590 [#allocation11]
        %v592 = vld [vmem:[%s591] sm:$0xff]
        %v593 = vunpack.c.0.s8 %v592
        %v594 = vunpack.c.1.s8 %v592
        %v595 = vunpack.c.2.s8 %v592
        %v596 = vunpack.c.3.s8 %v592
        %vm597 = vcmp.ne.s32.totalorder %v593, 0
        %vm598 = vcmp.ne.s32.totalorder %v594, 0
        %vm599 = vcmp.ne.s32.totalorder %v595, 0
        %vm600 = vcmp.ne.s32.totalorder %v596, 0
        %v601 = vsel %vm597, 255, %v577
        %v602 = vsel %vm598, 255, %v578
        %v603 = vsel %vm599, 255, %v579
        %v604 = vsel %vm600, 255, %v580
        %s605 = smul.addr %s589, 8
        %s606 = scalar_lea.vmem %s295, %s605 [#allocation13]
        %v607 = vld [vmem:[%s606] sm:$0xff]
        %v608 = vunpack.c.0.s8 %v607
        %v609 = vunpack.c.1.s8 %v607
        %v610 = vunpack.c.2.s8 %v607
        %v611 = vunpack.c.3.s8 %v607
        %vm612 = vcmp.ne.s32.totalorder %v608, 0
        %vm613 = vcmp.ne.s32.totalorder %v609, 0
        %vm614 = vcmp.ne.s32.totalorder %v610, 0
        %vm615 = vcmp.ne.s32.totalorder %v611, 0
        %v616 = vsel %vm612, 0, %v601
        %v617 = vsel %vm613, 0, %v602
        %v618 = vsel %vm614, 0, %v603
        %v619 = vsel %vm615, 0, %v604
        %v620 = vpack.c.b16 %v617, %v616
        %v621 = vpack.c.b16 %v619, %v618
        %v622 = vpack.c.b8 %v621, %v620
        %s623 = scalar_lea.vmem %s327, 16 [#allocation14]
        %624 = vst [vmem:[%s623] sm:$0xff] %v622
        %s625 = sadd.s32 %s339, 3
        %s626 = scalar_lea.vmem %s277, 48 [#allocation8]
        %v627 = vld [vmem:[%s626] sm:$0xf]
        %v628 = vld [vmem:[%s626 + $0x4] sm:$0xf]
        %v629 = vld [vmem:[%s626 + $0x8] sm:$0xf]
        %v630 = vld [vmem:[%s626 + $0xc] sm:$0xf]
        %v631 = vunpack.c.l.b16 %v627
        %v632 = vunpack.c.l.b16 %v628
        %v633 = vunpack.c.l.b16 %v629
        %v634 = vunpack.c.l.b16 %v630
        %s635 = sld [smem:[#allocation5 + %s625]]
        %v636 = vld [vmem:[#allocation2] sm:$0xff]
        %v637 = vld [vmem:[#allocation2 + $0x8] sm:$0xff]
        %v638 = vld [vmem:[#allocation2 + $0x10] sm:$0xff]
        %v639 = vld [vmem:[#allocation2 + $0x18] sm:$0xff]
        %v640 = vsub.s32 %v631, %v636
        %v641 = vsub.s32 %v632, %v637
        %v642 = vsub.s32 %v633, %v638
        %v643 = vsub.s32 %v634, %v639
        %v644 = vstv %s635
        %vm645 = vcmp.gt.s32.totalorder %v640, %v644
        %vm646 = vcmp.gt.s32.totalorder %v641, %v644
        %vm647 = vcmp.gt.s32.totalorder %v642, %v644
        %vm648 = vcmp.gt.s32.totalorder %v643, %v644
        %vm649 = vcmp.lt.s32.totalorder %v640, 0
        %v650 = vsub.s32 0, %v640
        %v651 = vsel %vm649, %v650, %v640
        %vm652 = vcmp.lt.s32.totalorder %v641, 0
        %v653 = vsub.s32 0, %v641
        %v654 = vsel %vm652, %v653, %v641
        %vm655 = vcmp.lt.s32.totalorder %v642, 0
        %v656 = vsub.s32 0, %v642
        %v657 = vsel %vm655, %v656, %v642
        %vm658 = vcmp.lt.s32.totalorder %v643, 0
        %v659 = vsub.s32 0, %v643
        %v660 = vsel %vm658, %v659, %v643
        %vm661 = vcmp.le.s32.totalorder %v651, %v644
        %vm662 = vcmp.le.s32.totalorder %v654, %v644
        %vm663 = vcmp.le.s32.totalorder %v657, %v644
        %vm664 = vcmp.le.s32.totalorder %v660, %v644
        %vm665 = vmxor %vm661, 1
        %vm666 = vmxor %vm662, 1
        %vm667 = vmxor %vm663, 1
        %vm668 = vmxor %vm664, 1
        %v669 = vsel %vm645, 255, 0
        %v670 = vsel %vm646, 255, 0
        %v671 = vsel %vm647, 255, 0
        %v672 = vsel %vm648, 255, 0
        %v673 = vsel %vm661, 127, %v669
        %v674 = vsel %vm662, 127, %v670
        %v675 = vsel %vm663, 127, %v671
        %v676 = vsel %vm664, 127, %v672
        %v677 = vsel %vm665, %v631, %v636
        %v678 = vsel %vm666, %v632, %v637
        %v679 = vsel %vm667, %v633, %v638
        %v680 = vsel %vm668, %v634, %v639
        %681 = vst [vmem:[#allocation2] sm:$0xff] %v677
        %682 = vst [vmem:[#allocation2 + $0x8] sm:$0xff] %v678
        %683 = vst [vmem:[#allocation2 + $0x10] sm:$0xff] %v679
        %684 = vst [vmem:[#allocation2 + $0x18] sm:$0xff] %v680
        %s685 = sld [smem:[#allocation4 + %s625]]
        %s686 = smul.addr %s685, 8
        %s687 = scalar_lea.vmem %s286, %s686 [#allocation11]
        %v688 = vld [vmem:[%s687] sm:$0xff]
        %v689 = vunpack.c.0.s8 %v688
        %v690 = vunpack.c.1.s8 %v688
        %v691 = vunpack.c.2.s8 %v688
        %v692 = vunpack.c.3.s8 %v688
        %vm693 = vcmp.ne.s32.totalorder %v689, 0
        %vm694 = vcmp.ne.s32.totalorder %v690, 0
        %vm695 = vcmp.ne.s32.totalorder %v691, 0
        %vm696 = vcmp.ne.s32.totalorder %v692, 0
        %v697 = vsel %vm693, 255, %v673
        %v698 = vsel %vm694, 255, %v674
        %v699 = vsel %vm695, 255, %v675
        %v700 = vsel %vm696, 255, %v676
        %s701 = smul.addr %s685, 8
        %s702 = scalar_lea.vmem %s295, %s701 [#allocation13]
        %v703 = vld [vmem:[%s702] sm:$0xff]
        %v704 = vunpack.c.0.s8 %v703
        %v705 = vunpack.c.1.s8 %v703
        %v706 = vunpack.c.2.s8 %v703
        %v707 = vunpack.c.3.s8 %v703
        %vm708 = vcmp.ne.s32.totalorder %v704, 0
        %vm709 = vcmp.ne.s32.totalorder %v705, 0
        %vm710 = vcmp.ne.s32.totalorder %v706, 0
        %vm711 = vcmp.ne.s32.totalorder %v707, 0
        %v712 = vsel %vm708, 0, %v697
        %v713 = vsel %vm709, 0, %v698
        %v714 = vsel %vm710, 0, %v699
        %v715 = vsel %vm711, 0, %v700
        %v716 = vpack.c.b16 %v713, %v712
        %v717 = vpack.c.b16 %v715, %v714
        %v718 = vpack.c.b8 %v717, %v716
        %s719 = scalar_lea.vmem %s327, 24 [#allocation14]
        %720 = vst [vmem:[%s719] sm:$0xff] %v718
        %s721 = sand.u32 %s145, 1
        %s722 = scalar_lea.sflag [#allocation10], %s721
        %s723 = sand.u32 %s145, 1
        %s724 = smul.addr %s723, 32
        %s725 = scalar_lea.vmem [#allocation14], %s724
        // Predicated region
        $region49: #{tpu_custom_call.1} parent=31 // pred_check
          %p726 = pneg %p155
        $region50: #{tpu_custom_call.1} parent=31 // pred_check_branch
          %728 = sbr.rel (%p726) target = $region52
        $region51: #{tpu_custom_call.1} parent=31 // pred_region
          %s729 = smul.u32 4, %s48
          %s731 = ssub.s32 512, 512
          %732 = vsyncadd %s722, %s731
          %s733 = smul.addr %s729, 2
          %s734 = sadd.s32 %s47, %s733
          %s735 = smul.addr %s734, 128
          %s736 = scalar_lea.hbm %s7, %s735
          %s737 = sshll.u32 %s725, 4
          %s738 = int_to_ptr.vmem [resolvable:$true] %s737
          %743 = dma.vmem_to_hbm [thread:$0]  %s738, 512, %s736, %s722, 128, 256, 8
        $region52: #{tpu_custom_call.1} parent=31 // pred_fallthru
          _
      $region32: #{tpu_custom_call.1} parent=5 // pred_fallthru
        _
      %p744 = scmp.le.s32.totalorder 2, %s38
      // Predicated region
      $region53: #{tpu_custom_call.1} parent=5 // pred_check
        %p745 = pneg %p744
      $region54: #{tpu_custom_call.1} parent=5 // pred_check_branch
        %747 = sbr.rel (%p745) target = $region56
      $region55: #{tpu_custom_call.1} parent=5 // pred_region
        %s748 = ssub.s32 %s38, 2
        // Predicated region
        $region57: #{tpu_custom_call.1} parent=55 // pred_check
          %p749 = pneg %p161
        $region58: #{tpu_custom_call.1} parent=55 // pred_check_branch
          %751 = sbr.rel (%p749) target = $region60
        $region59: #{tpu_custom_call.1} parent=55 // pred_region
          %s752 = sand.u32 %s146, 1
          %s753 = scalar_lea.sflag [#allocation10], %s752
          %s754 = sand.u32 %s146, 1
          %s755 = smul.addr %s754, 32
          %s756 = scalar_lea.vmem [#allocation14], %s755
          %757 = dma.done %s753, 512
        $region60: #{tpu_custom_call.1} parent=55 // pred_fallthru
          _
      $region56: #{tpu_custom_call.1} parent=5 // pred_fallthru
        _
    $region6: #{tpu_custom_call.1} parent=1 // loop_footer
      %s42 = sadd.s32 1, %s38
    $region7: #{tpu_custom_call.1} parent=1 // loop_footer_branch
      %37 = sbr.rel target = $region3
    $region8: #{tpu_custom_call.1} parent=1 // loop_exit
      _
    %758 = vsyncpa [#allocation9], 1
    %s759 = scalar_lea.sflag [#allocation9], 1
    %760 = vsyncpa %s759, 1
    %761 = vsyncpa [#allocation12], 1
    %s762 = scalar_lea.sflag [#allocation12], 1
    %763 = vsyncpa %s762, 1
    %764 = vsyncpa [#allocation10], 1
    %s765 = scalar_lea.sflag [#allocation10], 1
    %766 = vsyncpa %s765, 1

</llo_original>
